<compile_context>
chip_gen: v5e
topology: v5e:2x2
jax: 0.10.0
libtpu: 0.0.40
codegen_flags: <defaults>
</compile_context>

<pallas_src>
import functools

import jax
import jax.numpy as jnp
from jax.experimental import pallas as pl
from jax.experimental.pallas import tpu as pltpu


def _round_up(x, m):
    return ((x + m - 1) // m) * m


def _cdiv(a, b):
    return -(-a // b)


def _vmem_estimate(bblk, tl1, l2p, d, h, out_bytes):
    """Rough per-step VMEM footprint (double-buffered blocks + temporaries)."""
    x1_blk = bblk * tl1 * d * 2          # bf16 input block
    x2_blk = bblk * l2p * d * 2          # bf16 input block
    out_blk = bblk * tl1 * l2p * out_bytes
    weights = 2 * d * h * 2 + h * 4      # w1, w2 (bf16) + bias (f32)
    h2_scr = bblk * l2p * h * 2          # bf16 scratch (single-buffered)
    temps = bblk * tl1 * h * 6 + bblk * l2p * h * 6   # f32 + bf16 h1/h2 temps
    return 2 * (x1_blk + x2_blk + out_blk + weights) + h2_scr + temps


_VMEM_BUDGET = 40 * 1024 * 1024   # conservative: fits v7x (64 MiB physical)


def _choose_tiles(B, L1, L2, D, H, out_bytes, batch_block):
    # L2: lane-dense 128-padding only when L2 is already large; otherwise pad
    # just to the bf16 sublane pack (16) so reshapes stay free without blowing
    # up output writeback bytes.
    L2p = _round_up(L2, 128) if L2 >= 128 else _round_up(L2, 16)
    # L1: bf16 sublane pack is 16, keep the batch-flatten a free view collapse.
    L1p = _round_up(L1, 16)

    # Batch block: guarantee >=2 grid steps when B > 1 (v7x megacore / pipeline)
    # and minimize batch-pad waste (prefer the candidate with smallest padding).
    cap = max(1, min(batch_block, (B + 1) // 2 if B > 1 else 1))
    best, best_pad = 1, _round_up(B, 1)
    for cand in range(1, cap + 1):
        padded = _round_up(B, cand)
        if padded < best_pad or (padded == best_pad and cand > best):
            best, best_pad = cand, padded
    Bblk = best

    # L1 tile: largest multiple of 16 (target <= 512) fitting the VMEM budget.
    TL1 = _round_up(min(L1p, 512), 16)
    while (_vmem_estimate(Bblk, TL1, L2p, D, H, out_bytes) > _VMEM_BUDGET
           and TL1 > 16):
        TL1 = max(16, _round_up(TL1 // 2, 16))
    while (_vmem_estimate(Bblk, TL1, L2p, D, H, out_bytes) > _VMEM_BUDGET
           and Bblk > 1):
        Bblk -= 1
    # TODO(synk): if a single (Bblk=1, TL1=16) step still exceeds the budget
    # (very large L2), the L2 axis needs its own grid dimension as well.

    n_l1 = _cdiv(L1p, TL1)
    TL1 = _round_up(_cdiv(L1p, n_l1), 16)
    L1p = TL1 * n_l1
    Bp = _round_up(B, Bblk)
    return Bblk, Bp, TL1, n_l1, L1p, L2p


def _dpp_kernel(x1_ref, x2_ref, w1_ref, w2_ref, b2_ref, out_ref, h2_scr):
    # x1 (Bblk, TL1, D) bf16, x2 (Bblk, L2p, D) bf16, w1/w2 (D, H) bf16,
    # b2 (1, H) f32, out (Bblk, TL1, L2p), h2_scr (Bblk, L2p, H) bf16.
    bblk, tl1, d = x1_ref.shape
    _, l2p, _ = x2_ref.shape
    h = w1_ref.shape[1]

    # The x2 projection is shared by every L1 tile of the current batch block;
    # compute it once (first L1 step) into VMEM scratch and reuse it.
    @pl.when(pl.program_id(1) == 0)
    def _():
        x2f = x2_ref[...].reshape(bblk * l2p, d)
        h2 = jnp.maximum(
            jnp.dot(x2f, w2_ref[...], preferred_element_type=jnp.float32)
            + b2_ref[...], 0.0)
        h2_scr[...] = h2.astype(jnp.bfloat16).reshape(bblk, l2p, h)

    x1f = x1_ref[...].reshape(bblk * tl1, d)
    h1 = jnp.maximum(
        jnp.dot(x1f, w1_ref[...], preferred_element_type=jnp.float32), 0.0)
    h1b = h1.astype(jnp.bfloat16).reshape(bblk, tl1, h)

    # Transpose-free batched contraction over the hidden axis:
    # scores[b, q, k] = sum_h h1[b, q, h] * h2[b, k, h]
    scores = jax.lax.dot_general(
        h1b, h2_scr[...],
        dimension_numbers=(((2,), (2,)), ((0,), (0,))),
        preferred_element_type=jnp.float32)

    out_ref[...] = scores.astype(out_ref.dtype)


@functools.partial(jax.jit, static_argnames=("batch_block", "out_dtype"))
def dot_product_project(x1, x2, w1, w2, b2, *, batch_block=8,
                        out_dtype=jnp.float32):
    """x1: (B, L1, D), x2: (B, L2, D), w1/w2: (D, H) (= W^T), b2: (H,) -> (B, L1, L2)."""
    B, L1, D = x1.shape
    B2, L2, D2 = x2.shape
    assert B == B2 and D == D2, "x1.size(2) must equal x2.size(2)"
    H = w1.shape[1]
    out_bytes = jnp.dtype(out_dtype).itemsize

    Bblk, Bp, TL1, n_l1, L1p, L2p = _choose_tiles(
        B, L1, L2, D, H, out_bytes, batch_block)

    # bf16 MXU operands (halves input DMA); bias stays f32.
    x1 = x1.astype(jnp.bfloat16)
    x2 = x2.astype(jnp.bfloat16)
    w1 = w1.astype(jnp.bfloat16)
    w2 = w2.astype(jnp.bfloat16)
    b2 = b2.reshape(1, H).astype(jnp.float32)

    # Only pad when needed (skip the extra HBM round trip on aligned shapes).
    if (Bp, L1p) != (B, L1):
        x1 = jnp.pad(x1, ((0, Bp - B), (0, L1p - L1), (0, 0)))
    if (Bp, L2p) != (B, L2):
        x2 = jnp.pad(x2, ((0, Bp - B), (0, L2p - L2), (0, 0)))

    vmem_estimate = _vmem_estimate(Bblk, TL1, L2p, D, H, out_bytes)
    vmem_limit = int(min(max(vmem_estimate * 5 // 4 + (2 << 20), 32 << 20),
                         56 << 20))

    flops = 2 * B * L1 * D * H + 2 * B * L2 * D * H + 2 * B * L1 * L2 * H
    bytes_accessed = ((B * L1 * D + B * L2 * D + 2 * D * H) * 2 + H * 4
                      + B * L1 * L2 * out_bytes)
    cost = pl.CostEstimate(flops=flops, transcendentals=0,
                           bytes_accessed=bytes_accessed)

    out = pl.pallas_call(
        _dpp_kernel,
        out_shape=jax.ShapeDtypeStruct((Bp, L1p, L2p), out_dtype),
        grid_spec=pltpu.PrefetchScalarGridSpec(
            num_scalar_prefetch=0,
            grid=(Bp // Bblk, n_l1),
            in_specs=[
                pl.BlockSpec((Bblk, TL1, D), lambda b, l: (b, l, 0)),
                pl.BlockSpec((Bblk, L2p, D), lambda b, l: (b, 0, 0)),
                pl.BlockSpec((D, H), lambda b, l: (0, 0)),
                pl.BlockSpec((D, H), lambda b, l: (0, 0)),
                pl.BlockSpec((1, H), lambda b, l: (0, 0)),
            ],
            out_specs=pl.BlockSpec((Bblk, TL1, L2p), lambda b, l: (b, l, 0)),
            scratch_shapes=[pltpu.VMEM((Bblk, L2p, H), jnp.bfloat16)],
        ),
        compiler_params=pltpu.CompilerParams(
            dimension_semantics=("parallel", "arbitrary"),
            vmem_limit_bytes=vmem_limit),
        cost_estimate=cost,
    )(x1, x2, w1, w2, b2)

    # Strip padding (padded L2 rows see relu(b2) != 0, but those land only in
    # padded output columns, which are sliced off here).
    return out[:B, :L1, :L2]


if __name__ == "__main__":
    # Small shapes consistent with the module: batch=2, seq=8, dim=32, hidden=64.
    B, L1, L2, D, H = 2, 8, 8, 32, 64

    key = jax.random.PRNGKey(0)
    k_x1, k_x2, k_w1, k_w2, k_b2 = jax.random.split(key, 5)

    x1 = jax.random.normal(k_x1, (B, L1, D), dtype=jnp.float32)
    x2 = jax.random.normal(k_x2, (B, L2, D), dtype=jnp.float32)

    # Deterministic parameter init mirroring nn.Linear defaults; stored as W^T.
    bound = 1.0 / (D ** 0.5)
    w1 = jax.random.uniform(k_w1, (D, H), minval=-bound, maxval=bound,
                            dtype=jnp.float32)
    w2 = jax.random.uniform(k_w2, (D, H), minval=-bound, maxval=bound,
                            dtype=jnp.float32)
    b2 = jax.random.uniform(k_b2, (H,), minval=-bound, maxval=bound,
                            dtype=jnp.float32)

    scores = dot_product_project(x1, x2, w1, w2, b2)
    jax.block_until_ready(scores)

    # Pure-JAX reference with the same bf16 operand rounding / f32 accumulation.
    # (Deviates from the pure-f32 PyTorch module by up to ~1e-2 relative.)
    def bf16_round(a):
        return a.astype(jnp.bfloat16).astype(jnp.float32)

    x1r, x2r, w1r, w2r = map(bf16_round, (x1, x2, w1, w2))
    h1_ref = bf16_round(jnp.maximum(x1r @ w1r, 0.0))
    h2_ref = bf16_round(jnp.maximum(x2r @ w2r + b2, 0.0))
    ref = jnp.einsum("bqh,bkh->bqk", h1_ref, h2_ref)

    assert scores.shape == (B, L1, L2)
    assert jnp.allclose(scores, ref, atol=1e-2, rtol=1e-2)

    print("KERNEL_OK")
</pallas_src>

<mosaic_0001>
module attributes {stable_mosaic.version = 11 : i64} {
  func.func @_dpp_kernel(%arg0: i32, %arg1: i32, %arg2: memref<1x16x32xbf16, #tpu.memory_space<vmem>>, %arg3: memref<1x16x32xbf16, #tpu.memory_space<vmem>>, %arg4: memref<32x64xbf16, #tpu.memory_space<vmem>>, %arg5: memref<32x64xbf16, #tpu.memory_space<vmem>>, %arg6: memref<1x64xf32, #tpu.memory_space<vmem>>, %arg7: memref<1x16x16xf32, #tpu.memory_space<vmem>>, %arg8: memref<1x16x64xbf16, #tpu.memory_space<vmem>>) attributes {dimension_semantics = [#tpu.dimension_semantics<parallel>, #tpu.dimension_semantics<arbitrary>], iteration_bounds = array<i64: 2, 1>, scalar_prefetch = 0 : i64, scratch_operands = 1 : i64, tpu.core_type = #tpu.core_type<tc>, window_params = [{transform_indices = @transform_0, window_bounds = array<i64: 1, 16, 32>}, {transform_indices = @transform_1, window_bounds = array<i64: 1, 16, 32>}, {pipeline_mode = #tpu.pipeline_mode<synchronous>, transform_indices = @transform_2, window_bounds = array<i64: 32, 64>}, {pipeline_mode = #tpu.pipeline_mode<synchronous>, transform_indices = @transform_3, window_bounds = array<i64: 32, 64>}, {pipeline_mode = #tpu.pipeline_mode<synchronous>, transform_indices = @transform_4, window_bounds = array<i64: 1, 64>}, {transform_indices = @transform_5, window_bounds = array<i64: 1, 16, 16>}]} {
    %c0_i32 = arith.constant 0 : i32
    %0 = arith.cmpi eq, %arg1, %c0_i32 : i32
    %1 = arith.extui %0 : i1 to i32
    %c0_i32_0 = arith.constant 0 : i32
    %2 = arith.cmpi ne, %1, %c0_i32_0 : i32
    scf.if %2 {
      %c0_13 = arith.constant 0 : index
      %c0_14 = arith.constant 0 : index
      %c0_15 = arith.constant 0 : index
      %14 = vector.load %arg3[%c0_13, %c0_14, %c0_15] : memref<1x16x32xbf16, #tpu.memory_space<vmem>>, vector<1x16x32xbf16>
      %15 = vector.shape_cast %14 : vector<1x16x32xbf16> to vector<16x32xbf16>
      %c0_16 = arith.constant 0 : index
      %c0_17 = arith.constant 0 : index
      %16 = vector.load %arg5[%c0_16, %c0_17] : memref<32x64xbf16, #tpu.memory_space<vmem>>, vector<32x64xbf16>
      %cst_18 = arith.constant dense<0.000000e+00> : vector<16x64xf32>
      %17 = tpu.matmul %15, %16, %cst_18 {dimension_numbers = #tpu.dot_dimension_numbers<[1], [0], [0], [1], [0, 0, 1, 1], [], []>} : vector<16x32xbf16>, vector<32x64xbf16>, vector<16x64xf32> -> vector<16x64xf32>
      %c0_19 = arith.constant 0 : index
      %c0_20 = arith.constant 0 : index
      %18 = vector.load %arg6[%c0_19, %c0_20] : memref<1x64xf32, #tpu.memory_space<vmem>>, vector<1x64xf32>
      %19 = vector.broadcast %18 : vector<1x64xf32> to vector<16x64xf32>
      %20 = arith.addf %17, %19 : vector<16x64xf32>
      %cst_21 = arith.constant 0.000000e+00 : f32
      %21 = vector.broadcast %cst_21 : f32 to vector<16x64xf32>
      %22 = arith.maximumf %20, %21 : vector<16x64xf32>
      %23 = arith.truncf %22 : vector<16x64xf32> to vector<16x64xbf16>
      %24 = vector.shape_cast %23 : vector<16x64xbf16> to vector<1x16x64xbf16>
      %c0_22 = arith.constant 0 : index
      %c0_23 = arith.constant 0 : index
      %c0_24 = arith.constant 0 : index
      %25 = vector.load %arg8[%c0_22, %c0_23, %c0_24] : memref<1x16x64xbf16, #tpu.memory_space<vmem>>, vector<1x16x64xbf16>
      tpu.vector_store %arg8[%c0_22, %c0_23, %c0_24], %24 {strides = array<i32>} : memref<1x16x64xbf16, #tpu.memory_space<vmem>>, vector<1x16x64xbf16>,
    } else {
    }
    %c0 = arith.constant 0 : index
    %c0_1 = arith.constant 0 : index
    %c0_2 = arith.constant 0 : index
    %3 = vector.load %arg2[%c0, %c0_1, %c0_2] : memref<1x16x32xbf16, #tpu.memory_space<vmem>>, vector<1x16x32xbf16>
    %4 = vector.shape_cast %3 : vector<1x16x32xbf16> to vector<16x32xbf16>
    %c0_3 = arith.constant 0 : index
    %c0_4 = arith.constant 0 : index
    %5 = vector.load %arg4[%c0_3, %c0_4] : memref<32x64xbf16, #tpu.memory_space<vmem>>, vector<32x64xbf16>
    %cst = arith.constant dense<0.000000e+00> : vector<16x64xf32>
    %6 = tpu.matmul %4, %5, %cst {dimension_numbers = #tpu.dot_dimension_numbers<[1], [0], [0], [1], [0, 0, 1, 1], [], []>} : vector<16x32xbf16>, vector<32x64xbf16>, vector<16x64xf32> -> vector<16x64xf32>
    %cst_5 = arith.constant 0.000000e+00 : f32
    %7 = vector.broadcast %cst_5 : f32 to vector<16x64xf32>
    %8 = arith.maximumf %6, %7 : vector<16x64xf32>
    %9 = arith.truncf %8 : vector<16x64xf32> to vector<16x64xbf16>
    %10 = vector.shape_cast %9 : vector<16x64xbf16> to vector<1x16x64xbf16>
    %c0_6 = arith.constant 0 : index
    %c0_7 = arith.constant 0 : index
    %c0_8 = arith.constant 0 : index
    %11 = vector.load %arg8[%c0_6, %c0_7, %c0_8] : memref<1x16x64xbf16, #tpu.memory_space<vmem>>, vector<1x16x64xbf16>
    %cst_9 = arith.constant dense<0.000000e+00> : vector<1x16x16xf32>
    %12 = tpu.matmul %10, %11, %cst_9 {dimension_numbers = #tpu.dot_dimension_numbers<[2], [2], [1], [1], [0, 0, 0, 1, 1, 1], [0], [0]>} : vector<1x16x64xbf16>, vector<1x16x64xbf16>, vector<1x16x16xf32> -> vector<1x16x16xf32>
    %c0_10 = arith.constant 0 : index
    %c0_11 = arith.constant 0 : index
    %c0_12 = arith.constant 0 : index
    %13 = vector.load %arg7[%c0_10, %c0_11, %c0_12] : memref<1x16x16xf32, #tpu.memory_space<vmem>>, vector<1x16x16xf32>
    tpu.vector_store %arg7[%c0_10, %c0_11, %c0_12], %12 {strides = array<i32>} : memref<1x16x16xf32, #tpu.memory_space<vmem>>, vector<1x16x16xf32>,
    return
  }
  func.func @transform_0(%arg0: i32, %arg1: i32) -> (i32, i32, i32) {
    %c0_i32 = arith.constant 0 : i32
    %c0_i32_0 = arith.constant 0 : i32
    return %arg0, %arg1, %c0_i32 : i32, i32, i32
  }
  func.func @transform_1(%arg0: i32, %arg1: i32) -> (i32, i32, i32) {
    %c0_i32 = arith.constant 0 : i32
    %c0_i32_0 = arith.constant 0 : i32
    %c0_i32_1 = arith.constant 0 : i32
    return %arg0, %c0_i32, %c0_i32_0 : i32, i32, i32
  }
  func.func @transform_2(%arg0: i32, %arg1: i32) -> (i32, i32) {
    %c0_i32 = arith.constant 0 : i32
    %c0_i32_0 = arith.constant 0 : i32
    %c0_i32_1 = arith.constant 0 : i32
    return %c0_i32, %c0_i32_0 : i32, i32
  }
  func.func @transform_3(%arg0: i32, %arg1: i32) -> (i32, i32) {
    %c0_i32 = arith.constant 0 : i32
    %c0_i32_0 = arith.constant 0 : i32
    %c0_i32_1 = arith.constant 0 : i32
    return %c0_i32, %c0_i32_0 : i32, i32
  }
  func.func @transform_4(%arg0: i32, %arg1: i32) -> (i32, i32) {
    %c0_i32 = arith.constant 0 : i32
    %c0_i32_0 = arith.constant 0 : i32
    %c0_i32_1 = arith.constant 0 : i32
    return %c0_i32, %c0_i32_0 : i32, i32
  }
  func.func @transform_5(%arg0: i32, %arg1: i32) -> (i32, i32, i32) {
    %c0_i32 = arith.constant 0 : i32
    %c0_i32_0 = arith.constant 0 : i32
    return %arg0, %arg1, %c0_i32 : i32, i32, i32
  }
}

</mosaic_0001>

<llo_original>
// kernel: dot_product_project.1
$region0: #{dot_product_project.1}
  #allocation0 [shape = 'u32[]', space=smem, size = 0x4, offset = 0x4, fixed_abs, tag = 'smem constant byte address 0x4 - core index']
  #allocation1 [shape = 'u32[72,128]{1,0:T(1,128)}', space=vmem, size = 0x9000, scoped, tag = 'internal scratch']
  #allocation2 [shape = 'bf16[1,16,64]{2,1,0:T(8,128)(2,1)}', space=vmem, size = 0x1000, scoped, tag = 'scratch operand']
  %s0 = inlined_call_operand.vmem [shape: bf16[2,16,32], index: 0, kind: input, shape index: {}]
  %s1 = inlined_call_operand.vmem [shape: bf16[2,16,32], index: 1, kind: input, shape index: {}]
  %s2 = inlined_call_operand.vmem [shape: bf16[32,64], index: 2, kind: input, shape index: {}]
  %s3 = inlined_call_operand.vmem [shape: bf16[32,64], index: 3, kind: input, shape index: {}]
  %s4 = inlined_call_operand.vmem [shape: f32[1,64], index: 4, kind: input, shape index: {}]
  %s5 = inlined_call_operand.vmem [shape: f32[2,16,16], index: 5, kind: output, shape index: {}]
  %s6 = sld [smem:[#allocation0]]
  $region57: #{dot_product_project.1} parent=0
    _
  %s8 = ssub.s32 1, %s6
  %s9 = scalar_select 0, %s8, %s6
  loop: start=0, step=1, limit=4
  $region2: #{dot_product_project.1} parent=0 // loop_pre_header
    _
  $region3: #{dot_product_project.1} parent=0 // loop_header
    %s11 = sphi 0, %s15
    %p12 = scmp.ge.s32.totalorder %s11, 4
    %s18 = sphi 0, %s30
    %s19 = sphi 0, %s26
    %s20 = sphi 0, %s18
    %s21 = sphi 0, %s19
    %s22 = sphi 0, %s20
    %s23 = sphi 0, %s21
    %s35 = sphi 0, %s37
    %s38 = sphi 0, %s35
    %s39 = sphi 0, %s38
    %s55 = sphi 0, %s39
    %s61 = sphi 0, %s63
    %s64 = sphi 0, %s61
    %s65 = sphi 0, %s64
    %s81 = sphi 0, %s65
    %s85 = sphi 0, %s85
    %s87 = sphi 0, %s85
    %s88 = sphi 0, %s87
    %s102 = sphi 0, %s88
    %s106 = sphi 0, %s106
    %s108 = sphi 0, %s106
    %s109 = sphi 0, %s108
    %s123 = sphi 0, %s109
    %s127 = sphi 0, %s127
    %s129 = sphi 0, %s127
    %s130 = sphi 0, %s129
    %s144 = sphi 0, %s130
    %s152 = sphi 0, %s154
    %s155 = sphi 0, %s152
    %s156 = sphi 0, %s155
    %s172 = sphi 0, %s156
  $region4: #{dot_product_project.1} parent=0 // loop_header_branch
    %14 = sbr.rel (%p12) target = $region8
  $region5: #{dot_product_project.1} parent=0 // loop_body
    %s16 = ssub.s32 %s11, 1
    %s17 = ssub.s32 %s11, 2
    %s24 = sadd.s32 1, %s19
    %p25 = scmp.ge.s32.totalorder %s24, 1
    %s26 = scalar_select %p25, 0, %s24
    %s27 = sadd.s32 1, %s18
    %s28 = scalar_select %p25, %s27, %s18
    %p29 = scmp.ge.s32.totalorder %s28, 2
    %s30 = scalar_select %p29, 0, %s28
    %s31 = ssub.s32 %s18, %s30
    %s32 = ssub.s32 %s19, %s26
    %s33 = sor.u32 %s31, %s32
    %p34 = scmp.eq.s32.totalorder %s33, 0
    %s36 = sadd.s32 %s35, 1
    %s37 = scalar_select %p34, %s35, %s36
    %p40 = pneg %p34
    %p41 = scmp.eq.s32.totalorder %s11, 1
    %p42 = por %p40, %p41
    %p43 = scmp.ne.s32.totalorder %s35, %s38
    %p44 = scmp.eq.s32.totalorder %s11, 0
    %p45 = por %p43, %p44
    %p46 = scmp.ne.s32.totalorder %s35, %s38
    %p47 = scmp.eq.s32.totalorder %s16, 1
    %p48 = por %p46, %p47
    %p49 = scmp.ne.s32.totalorder %s38, %s39
    %p50 = scmp.eq.s32.totalorder %s16, 0
    %p51 = por %p49, %p50
    %p52 = scmp.ne.s32.totalorder %s38, %s39
    %p53 = scmp.eq.s32.totalorder %s17, 1
    %p54 = por %p52, %p53
    %p56 = scmp.ne.s32.totalorder %s39, %s55
    %p57 = scmp.eq.s32.totalorder %s17, 0
    %p58 = por %p56, %p57
    %s59 = ssub.s32 %s18, %s30
    %p60 = scmp.eq.s32.totalorder %s59, 0
    %s62 = sadd.s32 %s61, 1
    %s63 = scalar_select %p60, %s61, %s62
    %p66 = pneg %p60
    %p67 = scmp.eq.s32.totalorder %s11, 1
    %p68 = por %p66, %p67
    %p69 = scmp.ne.s32.totalorder %s61, %s64
    %p70 = scmp.eq.s32.totalorder %s11, 0
    %p71 = por %p69, %p70
    %p72 = scmp.ne.s32.totalorder %s61, %s64
    %p73 = scmp.eq.s32.totalorder %s16, 1
    %p74 = por %p72, %p73
    %p75 = scmp.ne.s32.totalorder %s64, %s65
    %p76 = scmp.eq.s32.totalorder %s16, 0
    %p77 = por %p75, %p76
    %p78 = scmp.ne.s32.totalorder %s64, %s65
    %p79 = scmp.eq.s32.totalorder %s17, 1
    %p80 = por %p78, %p79
    %p82 = scmp.ne.s32.totalorder %s65, %s81
    %p83 = scmp.eq.s32.totalorder %s17, 0
    %p84 = por %p82, %p83
    %s86 = sadd.s32 %s85, 1
    %p89 = scmp.eq.s32.totalorder %s11, 1
    %p90 = scmp.ne.s32.totalorder %s85, %s87
    %p91 = scmp.eq.s32.totalorder %s11, 0
    %p92 = por %p90, %p91
    %p93 = scmp.ne.s32.totalorder %s85, %s87
    %p94 = scmp.eq.s32.totalorder %s16, 1
    %p95 = por %p93, %p94
    %p96 = scmp.ne.s32.totalorder %s87, %s88
    %p97 = scmp.eq.s32.totalorder %s16, 0
    %p98 = por %p96, %p97
    %p99 = scmp.ne.s32.totalorder %s87, %s88
    %p100 = scmp.eq.s32.totalorder %s17, 1
    %p101 = por %p99, %p100
    %p103 = scmp.ne.s32.totalorder %s88, %s102
    %p104 = scmp.eq.s32.totalorder %s17, 0
    %p105 = por %p103, %p104
    %s107 = sadd.s32 %s106, 1
    %p110 = scmp.eq.s32.totalorder %s11, 1
    %p111 = scmp.ne.s32.totalorder %s106, %s108
    %p112 = scmp.eq.s32.totalorder %s11, 0
    %p113 = por %p111, %p112
    %p114 = scmp.ne.s32.totalorder %s106, %s108
    %p115 = scmp.eq.s32.totalorder %s16, 1
    %p116 = por %p114, %p115
    %p117 = scmp.ne.s32.totalorder %s108, %s109
    %p118 = scmp.eq.s32.totalorder %s16, 0
    %p119 = por %p117, %p118
    %p120 = scmp.ne.s32.totalorder %s108, %s109
    %p121 = scmp.eq.s32.totalorder %s17, 1
    %p122 = por %p120, %p121
    %p124 = scmp.ne.s32.totalorder %s109, %s123
    %p125 = scmp.eq.s32.totalorder %s17, 0
    %p126 = por %p124, %p125
    %s128 = sadd.s32 %s127, 1
    %p131 = scmp.eq.s32.totalorder %s11, 1
    %p132 = scmp.ne.s32.totalorder %s127, %s129
    %p133 = scmp.eq.s32.totalorder %s11, 0
    %p134 = por %p132, %p133
    %p135 = scmp.ne.s32.totalorder %s127, %s129
    %p136 = scmp.eq.s32.totalorder %s16, 1
    %p137 = por %p135, %p136
    %p138 = scmp.ne.s32.totalorder %s129, %s130
    %p139 = scmp.eq.s32.totalorder %s16, 0
    %p140 = por %p138, %p139
    %p141 = scmp.ne.s32.totalorder %s129, %s130
    %p142 = scmp.eq.s32.totalorder %s17, 1
    %p143 = por %p141, %p142
    %p145 = scmp.ne.s32.totalorder %s130, %s144
    %p146 = scmp.eq.s32.totalorder %s17, 0
    %p147 = por %p145, %p146
    %s148 = ssub.s32 %s18, %s30
    %s149 = ssub.s32 %s19, %s26
    %s150 = sor.u32 %s148, %s149
    %p151 = scmp.eq.s32.totalorder %s150, 0
    %s153 = sadd.s32 %s152, 1
    %s154 = scalar_select %p151, %s152, %s153
    %p157 = pneg %p151
    %p158 = scmp.eq.s32.totalorder %s11, 1
    %p159 = por %p157, %p158
    %p160 = scmp.ne.s32.totalorder %s152, %s155
    %p161 = scmp.eq.s32.totalorder %s11, 0
    %p162 = por %p160, %p161
    %p163 = scmp.ne.s32.totalorder %s152, %s155
    %p164 = scmp.eq.s32.totalorder %s16, 1
    %p165 = por %p163, %p164
    %p166 = scmp.ne.s32.totalorder %s155, %s156
    %p167 = scmp.eq.s32.totalorder %s16, 0
    %p168 = por %p166, %p167
    %p169 = scmp.ne.s32.totalorder %s155, %s156
    %p170 = scmp.eq.s32.totalorder %s17, 1
    %p171 = por %p169, %p170
    %p173 = scmp.ne.s32.totalorder %s156, %s172
    %p174 = scmp.eq.s32.totalorder %s17, 0
    %p175 = por %p173, %p174
    %p176 = scmp.le.s32.totalorder 1, %s11
    %p177 = scmp.lt.s32.totalorder %s11, 3
    %p178 = pnand %p176, %p177
    %p179 = pneg %p178
    // Predicated region
    $region9: #{dot_product_project.1} parent=5 // pred_check
      _
    $region10: #{dot_product_project.1} parent=5 // pred_check_branch
      %181 = sbr.rel (%p178) target = $region12
    $region11: #{dot_product_project.1} parent=5 // pred_region
      %s182 = ssub.s32 %s11, 1
      // Predicated region
      $region13: #{dot_product_project.1} parent=11 // pred_check
        %p183 = pneg %p98
      $region14: #{dot_product_project.1} parent=11 // pred_check_branch
        %185 = sbr.rel (%p183) target = $region16
      $region15: #{dot_product_project.1} parent=11 // pred_region
        _
      $region16: #{dot_product_project.1} parent=11 // pred_fallthru
        _
      // Predicated region
      $region17: #{dot_product_project.1} parent=11 // pred_check
        %p186 = pneg %p119
      $region18: #{dot_product_project.1} parent=11 // pred_check_branch
        %188 = sbr.rel (%p186) target = $region20
      $region19: #{dot_product_project.1} parent=11 // pred_region
        _
      $region20: #{dot_product_project.1} parent=11 // pred_fallthru
        _
      // Predicated region
      $region21: #{dot_product_project.1} parent=11 // pred_check
        %p189 = pneg %p140
      $region22: #{dot_product_project.1} parent=11 // pred_check_branch
        %191 = sbr.rel (%p189) target = $region24
      $region23: #{dot_product_project.1} parent=11 // pred_region
        _
      $region24: #{dot_product_project.1} parent=11 // pred_fallthru
        _
    $region12: #{dot_product_project.1} parent=5 // pred_fallthru
      _
    %p192 = scmp.lt.s32.totalorder %s11, 2
    // Predicated region
    $region25: #{dot_product_project.1} parent=5 // pred_check
      %p193 = pneg %p192
    $region26: #{dot_product_project.1} parent=5 // pred_check_branch
      %195 = sbr.rel (%p193) target = $region28
    $region27: #{dot_product_project.1} parent=5 // pred_region
      // Predicated region
      $region29: #{dot_product_project.1} parent=27 // pred_check
        %p196 = pneg %p45
      $region30: #{dot_product_project.1} parent=27 // pred_check_branch
        %198 = sbr.rel (%p196) target = $region32
      $region31: #{dot_product_project.1} parent=27 // pred_region
        %s199 = smul.u32 2, %s19
        %p200 = scmp.lt.s32.totalorder %s18, 1
        %s201 = scalar_select %p200, %s18, 1
        %p202 = scmp.lt.s32.totalorder %s199, 1
        %s203 = scalar_select %p202, %s199, 1
        %s204 = smul.addr %s201, 2
        %s205 = sadd.s32 %s203, %s204
        %s206 = smul.addr %s205, 4
        %s207 = scalar_lea.vmem %s0, %s206
        %s208 = smul.u32 2, %s19
      $region32: #{dot_product_project.1} parent=27 // pred_fallthru
        _
      // Predicated region
      $region33: #{dot_product_project.1} parent=27 // pred_check
        %p209 = pneg %p71
      $region34: #{dot_product_project.1} parent=27 // pred_check_branch
        %211 = sbr.rel (%p209) target = $region36
      $region35: #{dot_product_project.1} parent=27 // pred_region
        %p212 = scmp.lt.s32.totalorder %s18, 1
        %s213 = scalar_select %p212, %s18, 1
        %s214 = smul.addr %s213, 2
        %s215 = smul.addr %s214, 4
        %s216 = scalar_lea.vmem %s1, %s215
      $region36: #{dot_product_project.1} parent=27 // pred_fallthru
        _
    $region28: #{dot_product_project.1} parent=5 // pred_fallthru
      _
    %p217 = scmp.le.s32.totalorder 1, %s11
    %p218 = scmp.lt.s32.totalorder %s11, 3
    %p219 = pnand %p217, %p218
    %p220 = pneg %p219
    // Predicated region
    $region37: #{dot_product_project.1} parent=5 // pred_check
      _
    $region38: #{dot_product_project.1} parent=5 // pred_check_branch
      %222 = sbr.rel (%p219) target = $region40
    $region39: #{dot_product_project.1} parent=5 // pred_region
      %s223 = ssub.s32 %s11, 1
      %s224 = smul.u32 2, %s21
      %p225 = scmp.lt.s32.totalorder %s20, 1
      %s226 = scalar_select %p225, %s20, 1
      %p227 = scmp.lt.s32.totalorder %s224, 1
      %s228 = scalar_select %p227, %s224, 1
      %s229 = smul.addr %s226, 2
      %s230 = sadd.s32 %s228, %s229
      %s231 = smul.addr %s230, 4
      %s232 = scalar_lea.vmem %s0, %s231
      %p233 = pneg %p51
      %p234 = pneg %p48
      %p235 = scmp.lt.s32.totalorder %s20, 1
      %s236 = scalar_select %p235, %s20, 1
      %s237 = smul.addr %s236, 2
      %s238 = smul.addr %s237, 4
      %s239 = scalar_lea.vmem %s1, %s238
      %p240 = pneg %p77
      %p241 = pneg %p74
      %p242 = pneg %p98
      %p243 = pneg %p95
      %p244 = pneg %p119
      %p245 = pneg %p116
      %p246 = pneg %p140
      %p247 = pneg %p137
      %p248 = pneg %p168
      %p249 = pneg %p165
      %s250 = smul.u32 2, %s21
      %p251 = scmp.lt.s32.totalorder %s20, 1
      %s252 = scalar_select %p251, %s20, 1
      %p253 = scmp.lt.s32.totalorder %s250, 1
      %s254 = scalar_select %p253, %s250, 1
      %s255 = smul.addr %s252, 2
      %s256 = sadd.s32 %s254, %s255
      %s257 = smul.addr %s256, 8
      %s258 = scalar_lea.vmem %s5, %s257
      %s259 = smul.u32 2, %s21
      %p260 = scmp.lt.s32.totalorder %s20, 1
      %s261 = scalar_select %p260, %s20, 1
      %p262 = scmp.lt.s32.totalorder %s259, 1
      %s263 = scalar_select %p262, %s259, 1
      %s264 = smul.addr %s261, 2
      %s265 = sadd.s32 %s263, %s264
      %s266 = smul.addr %s265, 4
      %s267 = scalar_lea.vmem %s0, %s266
      %s268 = smul.u32 2, %s21
      %p269 = scmp.lt.s32.totalorder %s20, 1
      %s270 = scalar_select %p269, %s20, 1
      %s271 = smul.addr %s270, 2
      %s272 = smul.addr %s271, 4
      %s273 = scalar_lea.vmem %s1, %s272
      %s274 = smul.u32 2, %s21
      %p275 = scmp.lt.s32.totalorder %s20, 1
      %s276 = scalar_select %p275, %s20, 1
      %p277 = scmp.lt.s32.totalorder %s274, 1
      %s278 = scalar_select %p277, %s274, 1
      %s279 = smul.addr %s276, 2
      %s280 = sadd.s32 %s278, %s279
      %s281 = smul.addr %s280, 8
      %s282 = scalar_lea.vmem %s5, %s281
      %s283 = smul.u32 2, %s21
      %p285 = scmp.eq.s32.totalorder %s21, 0
      // Predicated region
      $region41: #{dot_product_project.1} parent=39 // pred_check
        %p286 = pneg %p285
      $region42: #{dot_product_project.1} parent=39 // pred_check_branch
        %288 = sbr.rel (%p286) target = $region44
      $region43: #{dot_product_project.1} parent=39 // pred_region
        %v289 = vld [vmem:[%s273] sm:$0xf]
        %v290 = vld [vmem:[%s273 + $0x4] sm:$0xf]
        %v291 = vld [vmem:[%s3] sm:$0xf]
        %v292 = vld [vmem:[%s3 + $0x4] sm:$0xf]
        %v293 = vld [vmem:[%s3 + $0x8] sm:$0xf]
        %v294 = vld [vmem:[%s3 + $0xc] sm:$0xf]
        %v295 = vld [vmem:[%s4] sm:$0x1]
        %v297 = vperm.slane %v295, 0
        %v301 = vunpack.c.l.b16 %v289
        %v302 = vunpack.c.l.b16 %v290
        %v303 = vpack.c.b16 %v302, %v301
        %v308 = vunpack.c.l.b16 %v291
        %v309 = vunpack.c.l.b16 %v292
        %v310 = vunpack.c.l.b16 %v293
        %v311 = vunpack.c.l.b16 %v294
        %v312 = vpack.c.b16 %v309, %v308
        %v313 = vpack.c.b16 %v311, %v310
        %vm316 = vcmask 261120
        %v318 = vsel %vm316, %v303, 0
        %320 = vmatpush.bf16.msra.mxu0 0
        %321 = vmatpush.bf16.msra.mxu0 0
        %322 = vmatpush.bf16.msra.mxu0 0
        %323 = vmatpush.bf16.msra.mxu0 0
        %324 = vmatpush.bf16.msra.mxu0 0
        %325 = vmatpush.bf16.msra.mxu0 0
        %326 = vmatpush.bf16.msra.mxu0 %v313
        %327 = vmatpush.bf16.msra.mxu0 %v312
        %328 = vmatmul.bf16.gmra.mxu0 %v318
        %v329 = vpop.f32.mrf.mxu0
        %v330 = vadd.f32 %v297, %v329
        %v331 = vpop.f32.mrf.mxu0
        %v332 = vadd.f32 %v297, %v331
        %333 = vdwg.mxu0
        %v334 = vmax.f32 %v330, 0.0
        %v335 = vmax.f32 %v332, 0.0
        %v336 = vpack.c.bf16 %v334, %v334
        %v337 = vpack.c.bf16 %v335, %v335
        %vm338 = vcmask 519168
        %339 = vst.msk [vmem:[#allocation2] sm:$0xf] %vm338, %v336
        %340 = vst.msk [vmem:[#allocation2 + $0x4] sm:$0xf] %vm338, %v337
      $region44: #{dot_product_project.1} parent=39 // pred_fallthru
        _
      %v341 = vld [vmem:[%s267] sm:$0xf]
      %v342 = vld [vmem:[%s267 + $0x4] sm:$0xf]
      %v343 = vld [vmem:[%s2] sm:$0xf]
      %v344 = vld [vmem:[%s2 + $0x4] sm:$0xf]
      %v345 = vld [vmem:[%s2 + $0x8] sm:$0xf]
      %v346 = vld [vmem:[%s2 + $0xc] sm:$0xf]
      %v349 = vunpack.c.l.b16 %v341
      %v350 = vunpack.c.l.b16 %v342
      %v351 = vpack.c.b16 %v350, %v349
      %v356 = vunpack.c.l.b16 %v343
      %v357 = vunpack.c.l.b16 %v344
      %v358 = vunpack.c.l.b16 %v345
      %v359 = vunpack.c.l.b16 %v346
      %v360 = vpack.c.b16 %v357, %v356
      %v361 = vpack.c.b16 %v359, %v358
      %vm364 = vcmask 261120
      %v366 = vsel %vm364, %v351, 0
      %368 = vmatpush.bf16.msra.mxu0 0
      %369 = vmatpush.bf16.msra.mxu0 0
      %370 = vmatpush.bf16.msra.mxu0 0
      %371 = vmatpush.bf16.msra.mxu0 0
      %372 = vmatpush.bf16.msra.mxu0 0
      %373 = vmatpush.bf16.msra.mxu0 0
      %374 = vmatpush.bf16.msra.mxu0 %v361
      %375 = vmatpush.bf16.msra.mxu0 %v360
      %376 = vmatmul.bf16.gmra.mxu0 %v366
      %v377 = vpop.f32.mrf.mxu0
      %v378 = vadd.f32 0.0, %v377
      %v379 = vpop.f32.mrf.mxu0
      %v380 = vadd.f32 0.0, %v379
      %381 = vdwg.mxu0
      %v382 = vmax.f32 %v378, 0.0
      %v383 = vmax.f32 %v380, 0.0
      %v384 = vpack.c.bf16 %v382, %v382
      %v385 = vpack.c.bf16 %v383, %v383
      %v386 = vld [vmem:[#allocation2] sm:$0xf]
      %v387 = vld [vmem:[#allocation2 + $0x4] sm:$0xf]
      %v390 = vunpack.c.l.b16 %v384
      %v391 = vunpack.c.l.b16 %v385
      %v392 = vpack.c.b16 %v391, %v390
      %v395 = vunpack.c.l.b16 %v386
      %v396 = vunpack.c.l.b16 %v387
      %v397 = vpack.c.b16 %v396, %v395
      %vm398 = vcmask 523264
      %v400 = vsel %vm398, %v392, 0
      %v403 = vsel %vm398, %v397, 0
      %405 = vmatpush.bf16.xpose.msra.mxu0 0
      %406 = vmatpush.bf16.xpose.msra.mxu0 0
      %407 = vmatpush.bf16.xpose.msra.mxu0 0
      %408 = vmatpush.bf16.xpose.msra.mxu0 0
      %409 = vmatpush.bf16.xpose.msra.mxu0 0
      %410 = vmatpush.bf16.xpose.msra.mxu0 0
      %411 = vmatpush.bf16.xpose.msra.mxu0 0
      %412 = vmatpush.bf16.xpose.msra.mxu0 %v403
      %413 = vmatmul.bf16.gmra.mxu0 %v400
      %v414 = vpop.f32.mrf.mxu0
      %v415 = vadd.f32 0.0, %v414
      %v416 = vpop.f32.mrf.mxu0
      %v417 = vadd.f32 0.0, %v416
      %418 = vdwg.mxu0
      %vm419 = vcmask 130048
      %420 = vst.msk [vmem:[%s282] sm:$0xff] %vm419, %v415
      %421 = vst.msk [vmem:[%s282 + $0x8] sm:$0xff] %vm419, %v417
      %s422 = smul.u32 2, %s21
      %p423 = scmp.lt.s32.totalorder %s20, 1
      %s424 = scalar_select %p423, %s20, 1
      %p425 = scmp.lt.s32.totalorder %s422, 1
      %s426 = scalar_select %p425, %s422, 1
      %s427 = smul.addr %s424, 2
      %s428 = sadd.s32 %s426, %s427
      %s429 = smul.addr %s428, 8
      %s430 = scalar_lea.vmem %s5, %s429
      // Predicated region
      $region45: #{dot_product_project.1} parent=39 // pred_check
        %p431 = pneg %p165
      $region46: #{dot_product_project.1} parent=39 // pred_check_branch
        %433 = sbr.rel (%p431) target = $region48
      $region47: #{dot_product_project.1} parent=39 // pred_region
        %s434 = smul.u32 2, %s21
      $region48: #{dot_product_project.1} parent=39 // pred_fallthru
        _
    $region40: #{dot_product_project.1} parent=5 // pred_fallthru
      _
    %p435 = scmp.le.s32.totalorder 2, %s11
    // Predicated region
    $region49: #{dot_product_project.1} parent=5 // pred_check
      %p436 = pneg %p435
    $region50: #{dot_product_project.1} parent=5 // pred_check_branch
      %438 = sbr.rel (%p436) target = $region52
    $region51: #{dot_product_project.1} parent=5 // pred_region
      %s439 = ssub.s32 %s11, 2
      // Predicated region
      $region53: #{dot_product_project.1} parent=51 // pred_check
        %p440 = pneg %p171
      $region54: #{dot_product_project.1} parent=51 // pred_check_branch
        %442 = sbr.rel (%p440) target = $region56
      $region55: #{dot_product_project.1} parent=51 // pred_region
        %s443 = smul.u32 2, %s23
        %p444 = scmp.lt.s32.totalorder %s22, 1
        %s445 = scalar_select %p444, %s22, 1
        %p446 = scmp.lt.s32.totalorder %s443, 1
        %s447 = scalar_select %p446, %s443, 1
        %s448 = smul.addr %s445, 2
        %s449 = sadd.s32 %s447, %s448
        %s450 = smul.addr %s449, 8
        %s451 = scalar_lea.vmem %s5, %s450
      $region56: #{dot_product_project.1} parent=51 // pred_fallthru
        _
    $region52: #{dot_product_project.1} parent=5 // pred_fallthru
      _
  $region6: #{dot_product_project.1} parent=0 // loop_footer
    %s15 = sadd.s32 1, %s11
  $region7: #{dot_product_project.1} parent=0 // loop_footer_branch
    %10 = sbr.rel target = $region3
  $region8: #{dot_product_project.1} parent=0 // loop_exit
    _

</llo_original>
